<compile_context>
chip_gen: v7x
topology: tpu7x:2x2x1
jax: 0.10.0
libtpu: 0.0.40
codegen_flags: <defaults>
</compile_context>

<pallas_src>
import functools
import math

import jax
import jax.numpy as jnp
from jax.experimental import pallas as pl
from jax.experimental.pallas import tpu as pltpu


# ----------------------------------------------------------------------------
# RoPE module forward (the spec): produce the [cos | sin] table.
# ----------------------------------------------------------------------------
def _rope_table_kernel(freq_ref, out_ref):
    s, d = out_ref.shape
    half = d // 2
    t = jax.lax.broadcasted_iota(jnp.int32, (s, half), 0).astype(jnp.float32)
    ang = t * freq_ref[...]                       # (S, half)
    out_ref[...] = jnp.concatenate([jnp.cos(ang), jnp.sin(ang)], axis=-1)


def rope_forward(x, seq_dim=1):
    """Pallas equivalent of RoPE.forward.

    x: [batch, seq_len, n_heads, head_dim]; returns the broadcastable table
    (1, seq_len, 1, head_dim) = [cos | sin], exactly like the PyTorch module.
    """
    seq_len = x.shape[seq_dim]
    hidden_dim = x.shape[-1]
    half = hidden_dim // 2
    freqs = 1.0 / (10000.0 ** (jnp.arange(half, dtype=jnp.float32) / half))
    table = pl.pallas_call(
        _rope_table_kernel,
        out_shape=jax.ShapeDtypeStruct((seq_len, hidden_dim), jnp.float32),
        grid=(1,),
        in_specs=[pl.BlockSpec((1, half), lambda i: (0, 0))],
        out_specs=pl.BlockSpec((seq_len, hidden_dim), lambda i: (0, 0)),
    )(freqs.reshape(1, half))
    # TODO(synk): torch's RoPE caches cos/sin across calls via Python-side module
    # state; there is no stateful equivalent here, the table is recomputed per call.
    return table.reshape(1, seq_len, 1, hidden_dim)


# ----------------------------------------------------------------------------
# Fused DiT block kernel (consumer of the RoPE table).
# ----------------------------------------------------------------------------
def _dit_block_kernel(n_heads, head_dim,
                      x_ref, mods_ref, cos_ref, sin_ref,
                      wq_ref, bq_ref, wk_ref, bk_ref, wv_ref, bv_ref,
                      wp_ref, bp_ref, w1_ref, b1_ref, w2_ref, b2_ref,
                      o_ref, attn_ref):
    x = x_ref[0]                                   # (S, H)
    mods = mods_ref[0]                             # (6, H) adaLN modulation (from XLA)
    shift_msa, scale_msa, gate_msa = mods[0:1, :], mods[1:2, :], mods[2:3, :]
    shift_mlp, scale_mlp, gate_mlp = mods[3:4, :], mods[4:5, :], mods[5:6, :]

    def layer_norm(v):                             # LayerNorm(affine=False, eps=1e-6)
        mu = jnp.mean(v, axis=-1, keepdims=True)
        var = jnp.mean(jnp.square(v - mu), axis=-1, keepdims=True)
        return (v - mu) * jax.lax.rsqrt(var + 1e-6)

    # ---- attention branch ----
    h_in = layer_norm(x) * (1.0 + scale_msa) + shift_msa
    # wq/wk columns were permuted in the wrapper to a global [all-even | all-odd]
    # layout, so q/k split into two contiguous (S, H/2) halves across ALL heads.
    q = jnp.dot(h_in, wq_ref[...], preferred_element_type=jnp.float32) + bq_ref[...]
    k = jnp.dot(h_in, wk_ref[...], preferred_element_type=jnp.float32) + bk_ref[...]
    v = jnp.dot(h_in, wv_ref[...], preferred_element_type=jnp.float32) + bv_ref[...]

    Hh = q.shape[-1] // 2
    cos_t = cos_ref[...]                           # (S, H/2), cos tiled per head
    sin_t = sin_ref[...]
    qE, qO = q[:, :Hh], q[:, Hh:]
    kE, kO = k[:, :Hh], k[:, Hh:]
    # RoPE for every head in one full-width vectorized pass (hoisted out of the loop).
    qE_r = qE * cos_t - qO * sin_t
    qO_r = qE * sin_t + qO * cos_t
    kE_r = kE * cos_t - kO * sin_t
    kO_r = kE * sin_t + kO * cos_t

    inv_sqrt_d = 1.0 / math.sqrt(head_dim)
    dh = head_dim // 2
    dims = (((1,), (1,)), ((), ()))
    # TODO(synk): for large S this materializes an (S, S) score tile per head;
    # production shapes should tile KV flash-style (online softmax) instead.
    for h in range(n_heads):
        e0, v0 = h * dh, h * head_dim
        s = (jax.lax.dot_general(qE_r[:, e0:e0 + dh], kE_r[:, e0:e0 + dh], dims,
                                 preferred_element_type=jnp.float32)
             + jax.lax.dot_general(qO_r[:, e0:e0 + dh], kO_r[:, e0:e0 + dh], dims,
                                   preferred_element_type=jnp.float32)) * inv_sqrt_d
        s = s - jnp.max(s, axis=-1, keepdims=True)
        p = jnp.exp(s)
        # EUP approximate reciprocal instead of a full-tile VPU divide.
        p = p * pl.reciprocal(jnp.sum(p, axis=-1, keepdims=True), approx=True)
        # Per-head result goes straight into the (S, H) VMEM scratch (no concat).
        attn_ref[:, v0:v0 + head_dim] = jnp.dot(
            p, v[:, v0:v0 + head_dim], preferred_element_type=jnp.float32)

    attn = jnp.dot(attn_ref[...], wp_ref[...],
                   preferred_element_type=jnp.float32) + bp_ref[...]
    x = x + gate_msa * attn

    # ---- MLP branch ----
    h2 = layer_norm(x) * (1.0 + scale_mlp) + shift_mlp
    u = jnp.dot(h2, w1_ref[...], preferred_element_type=jnp.float32) + b1_ref[...]
    u = jax.nn.gelu(u, approximate=True)           # GELU(tanh)
    u = jnp.dot(u, w2_ref[...], preferred_element_type=jnp.float32) + b2_ref[...]
    x = x + gate_mlp * u

    o_ref[0] = x.astype(o_ref.dtype)


def dit_block_forward(x, c, pos_emb, params, n_heads):
    B, S, H = x.shape
    head_dim = H // n_heads
    dh = head_dim // 2
    HM = params["w1"].shape[1]

    # adaLN projection in plain XLA over the whole batch: M=1 per sample is a poor
    # MXU shape in-kernel and wa (6*H^2) is the largest weight -> keep it out of VMEM.
    mods = (c @ params["wa"] + params["ba"]).reshape(B, 6, H)

    # Permute Q/K output features to a global [all heads' even | all heads' odd]
    # layout so the in-kernel RoPE rotation is a single contiguous full-width pass.
    # QK^T is invariant to this (consistent) feature permutation of q and k.
    even_idx = (jnp.arange(n_heads)[:, None] * head_dim
                + 2 * jnp.arange(dh)[None, :]).reshape(-1)
    perm = jnp.concatenate([even_idx, even_idx + 1])
    wq, bq = params["wq"][:, perm], params["bq"][perm]
    wk, bk = params["wk"][:, perm], params["bk"][perm]

    # cos/sin tables tiled per head: (S, H/2), matching the permuted q/k layout.
    cos_t = jnp.tile(pos_emb[:, :dh], (1, n_heads))
    sin_t = jnp.tile(pos_emb[:, dh:], (1, n_heads))

    r2 = lambda v: v.reshape(1, -1)

    def const_spec(shape):
        # Constant across the batch grid -> single-buffer to halve resident VMEM.
        return pl.BlockSpec(shape, lambda b, _n=len(shape): (0,) * _n,
                            pipeline_mode=pl.Buffered(1))

    grid_spec = pltpu.PrefetchScalarGridSpec(
        num_scalar_prefetch=0,
        grid=(B,),
        in_specs=[
            pl.BlockSpec((1, S, H), lambda b: (b, 0, 0)),       # x
            pl.BlockSpec((1, 6, H), lambda b: (b, 0, 0)),       # adaLN modulation
            const_spec((S, H // 2)), const_spec((S, H // 2)),   # cos, sin (tiled)
            const_spec((H, H)), const_spec((1, H)),             # wq, bq (permuted)
            const_spec((H, H)), const_spec((1, H)),             # wk, bk (permuted)
            const_spec((H, H)), const_spec((1, H)),             # wv, bv
            const_spec((H, H)), const_spec((1, H)),             # wproj, bproj
            const_spec((H, HM)), const_spec((1, HM)),           # mlp w1, b1
            const_spec((HM, H)), const_spec((1, H)),            # mlp w2, b2
        ],
        out_specs=pl.BlockSpec((1, S, H), lambda b: (b, 0, 0)),
        scratch_shapes=[pltpu.VMEM((S, H), jnp.float32)],       # attention accumulator
    )

    kernel = functools.partial(_dit_block_kernel, n_heads, head_dim)
    return pl.pallas_call(
        kernel,
        out_shape=jax.ShapeDtypeStruct((B, S, H), x.dtype),
        grid_spec=grid_spec,
        compiler_params=pltpu.CompilerParams(
            dimension_semantics=("parallel",),
            # Defaults are 16 MiB (v5e) / 32 MiB (v6e, v7x); real DiT sizes need
            # more. Kept safely below v7x's 64 MiB per-TC physical VMEM.
            vmem_limit_bytes=48 * 1024 * 1024,
        ),
    )(x, mods, cos_t, sin_t,
      wq, r2(bq), wk, r2(bk), params["wv"], r2(params["bv"]),
      params["wp"], r2(params["bp"]),
      params["w1"], r2(params["b1"]), params["w2"], r2(params["b2"]))


# ----------------------------------------------------------------------------
# Pure-JAX reference mirroring the PyTorch modules exactly.
# ----------------------------------------------------------------------------
def ref_forward(x, c, pos_emb, p, n_heads):
    B, S, H = x.shape
    d = H // n_heads
    ada = c @ p["wa"] + p["ba"]
    sm, cm, gm, smlp, cmlp, gmlp = jnp.split(ada, 6, axis=1)

    def ln(v):
        mu = jnp.mean(v, -1, keepdims=True)
        var = jnp.mean((v - mu) ** 2, -1, keepdims=True)
        return (v - mu) / jnp.sqrt(var + 1e-6)

    def mod(v, sh, sc):
        return v * (1 + sc[:, None, :]) + sh[:, None, :]

    def rope(t):  # (B, S, nh, d), interleaved even/odd like torch
        te, to = t[..., 0::2], t[..., 1::2]
        pe = pos_emb[None, :, None, :]
        cos, sin = pe[..., :d // 2], pe[..., d // 2:]
        return jnp.concatenate([te * cos - to * sin, te * sin + to * cos], axis=-1)

    h = mod(ln(x), sm, cm)
    q = (h @ p["wq"] + p["bq"]).reshape(B, S, n_heads, d)
    k = (h @ p["wk"] + p["bk"]).reshape(B, S, n_heads, d)
    v = (h @ p["wv"] + p["bv"]).reshape(B, S, n_heads, d)
    q, k = rope(q), rope(k)
    q = q.transpose(0, 2, 1, 3)
    k = k.transpose(0, 2, 1, 3)
    v = v.transpose(0, 2, 1, 3)
    s = jnp.einsum("bhsd,bhtd->bhst", q, k) / math.sqrt(d)
    pr = jax.nn.softmax(s, axis=-1)
    o = jnp.einsum("bhst,bhtd->bhsd", pr, v).transpose(0, 2, 1, 3).reshape(B, S, H)
    o = o @ p["wp"] + p["bp"]
    x = x + gm[:, None, :] * o
    h2 = mod(ln(x), smlp, cmlp)
    u = jax.nn.gelu(h2 @ p["w1"] + p["b1"], approximate=True)
    u = u @ p["w2"] + p["b2"]
    return x + gmlp[:, None, :] * u


if __name__ == "__main__":
    B, S, H, NH = 2, 16, 32, 4
    D = H // NH
    HM = 4 * H  # mlp_ratio=4.0

    key = jax.random.PRNGKey(0)
    ks = jax.random.split(key, 16)

    def w(k, shape, scale=0.05):
        return (scale * jax.random.normal(k, shape)).astype(jnp.float32)

    params = dict(
        wq=w(ks[0], (H, H)), bq=w(ks[1], (H,)),
        wk=w(ks[2], (H, H)), bk=w(ks[3], (H,)),
        wv=w(ks[4], (H, H)), bv=w(ks[5], (H,)),
        wp=w(ks[6], (H, H)), bp=w(ks[7], (H,)),
        w1=w(ks[8], (H, HM)), b1=w(ks[9], (HM,)),
        w2=w(ks[10], (HM, H)), b2=w(ks[11], (H,)),
        # PyTorch AdaLNZero zero-inits these (block == identity at init); nonzero
        # deterministic values exercise the full path.
        wa=w(ks[12], (H, 6 * H)), ba=w(ks[13], (6 * H,)),
    )

    x = jax.random.normal(ks[14], (B, S, H), jnp.float32)
    c = jax.random.normal(ks[15], (B, H), jnp.float32)

    # --- RoPE forward (the spec): input [batch, seq, n_heads, head_dim] ---
    x4 = x.reshape(B, S, NH, D)
    pos4 = jax.block_until_ready(rope_forward(x4))          # (1, S, 1, D) = [cos|sin]

    ang = (jnp.arange(S, dtype=jnp.float32)[:, None]
           * (1.0 / 10000.0 ** (jnp.arange(D // 2, dtype=jnp.float32) / (D // 2))))
    pos_closed_form = jnp.concatenate([jnp.cos(ang), jnp.sin(ang)], axis=-1)
    assert pos4.shape == (1, S, 1, D)
    assert jnp.allclose(pos4.reshape(S, D), pos_closed_form, atol=1e-4, rtol=1e-4), \
        "RoPE table mismatch"

    # --- fused DiT block consuming the RoPE table ---
    pos_emb = pos4.reshape(S, D)
    out = jax.block_until_ready(dit_block_forward(x, c, pos_emb, params, NH))

    ref = ref_forward(x, c, pos_emb, params, NH)
    err = float(jnp.max(jnp.abs(out - ref)))
    # Tolerance slightly loosened vs f32-exact because softmax normalization now
    # uses the EUP approximate reciprocal (per the performance review).
    assert jnp.allclose(out, ref, atol=2e-3, rtol=2e-3), f"max abs err {err}"
    print("KERNEL_OK")
</pallas_src>

<mosaic_0001>
module attributes {stable_mosaic.version = 11 : i64} {
  func.func @_rope_table_kernel(%arg0: i32, %arg1: memref<1x4xf32, #tpu.memory_space<vmem>>, %arg2: memref<16x8xf32, #tpu.memory_space<vmem>>) attributes {dimension_semantics = [#tpu.dimension_semantics<arbitrary>], iteration_bounds = array<i64: 1>, scalar_prefetch = 0 : i64, scratch_operands = 0 : i64, tpu.core_type = #tpu.core_type<tc>, window_params = [{pipeline_mode = #tpu.pipeline_mode<synchronous>, transform_indices = @transform_0, window_bounds = array<i64: 1, 4>}, {pipeline_mode = #tpu.pipeline_mode<synchronous>, transform_indices = @transform_1, window_bounds = array<i64: 16, 8>}]} {
    %0 = tpu.iota {dimensions = array<i32: 0>} : vector<16x4xi32>
    %1 = arith.sitofp %0 : vector<16x4xi32> to vector<16x4xf32>
    %c0 = arith.constant 0 : index
    %c0_0 = arith.constant 0 : index
    %2 = vector.load %arg1[%c0, %c0_0] : memref<1x4xf32, #tpu.memory_space<vmem>>, vector<1x4xf32>
    %3 = vector.broadcast %2 : vector<1x4xf32> to vector<16x4xf32>
    %4 = arith.mulf %1, %3 : vector<16x4xf32>
    %5 = math.cos %4 : vector<16x4xf32>
    %6 = math.sin %4 : vector<16x4xf32>
    %7 = tpu.concatenate %5, %6 in 1 : vector<16x4xf32>, vector<16x4xf32> -> vector<16x8xf32>
    %c0_1 = arith.constant 0 : index
    %c0_2 = arith.constant 0 : index
    %8 = vector.load %arg2[%c0_1, %c0_2] : memref<16x8xf32, #tpu.memory_space<vmem>>, vector<16x8xf32>
    tpu.vector_store %arg2[%c0_1, %c0_2], %7 {strides = array<i32>} : memref<16x8xf32, #tpu.memory_space<vmem>>, vector<16x8xf32>,
    return
  }
  func.func @transform_0(%arg0: i32) -> (i32, i32) {
    %c0_i32 = arith.constant 0 : i32
    %c0_i32_0 = arith.constant 0 : i32
    %c0_i32_1 = arith.constant 0 : i32
    return %c0_i32, %c0_i32_0 : i32, i32
  }
  func.func @transform_1(%arg0: i32) -> (i32, i32) {
    %c0_i32 = arith.constant 0 : i32
    %c0_i32_0 = arith.constant 0 : i32
    %c0_i32_1 = arith.constant 0 : i32
    return %c0_i32, %c0_i32_0 : i32, i32
  }
}

</mosaic_0001>

<llo_original>
// kernel: tpu_custom_call.1
$region0: #{tpu_custom_call.1}
  #allocation0 [shape = 'u32[]', space=smem, size = 0x4, offset = 0x4, fixed_abs, tag = 'smem constant byte address 0x4 - core index']
  #allocation1 [shape = 'u32[144,128]{1,0:T(1,128)}', space=vmem, size = 0x12000, scoped, tag = 'internal scratch']
  %s0 = inlined_call_operand.hbm [shape: f32[1,4], index: 0, kind: input, shape index: {}]
  %s1 = inlined_call_operand.vmem [shape: f32[16,8], index: 1, kind: output, shape index: {}]
  %s2 = sld [smem:[#allocation0]]
  $region18: #{tpu_custom_call.1} parent=0
    _
  %s4 = ssub.s32 1, %s2
  %s5 = scalar_select 0, %s4, %s2
  $region1: #{tpu_custom_call.1} parent=0
    #allocation2 [shape = 'u8[512]{0}', space=vmem, size = 0x400, scoped, tag = 'input window, operand 0, single buffered']
    #allocation3 [shape = 's32[1]{0}', space=sflag, size = 0x4, scoped, tag = 'scoped memory for tpu_custom_call.1']
    %6 = vsyncpa [#allocation3], 0
    // Predicated region
    $region2: #{tpu_custom_call.1} parent=1 // pred_check
      _
    $region3: #{tpu_custom_call.1} parent=1 // pred_check_branch
      %8 = sbr.rel (0) target = $region5
    $region4: #{tpu_custom_call.1} parent=1 // pred_region
      %s10 = ssub.s32 16, 16
      %11 = vsyncadd [#allocation3], %s10
      %s13 = sshll.u32 [#allocation2], 4
      %s14 = int_to_ptr.vmem [resolvable:$true] %s13
      %16 = dma.hbm_to_vmem [thread:$0]  %s0, 16, %s14, [#allocation3]
    $region5: #{tpu_custom_call.1} parent=1 // pred_fallthru
      _
    // Predicated region
    $region6: #{tpu_custom_call.1} parent=1 // pred_check
      _
    $region7: #{tpu_custom_call.1} parent=1 // pred_check_branch
      %18 = sbr.rel (0) target = $region9
    $region8: #{tpu_custom_call.1} parent=1 // pred_region
      %19 = dma.done [#allocation3], 16
    $region9: #{tpu_custom_call.1} parent=1 // pred_fallthru
      _
    %v20 = vlaneseq
    %v21 = vshrl.u32 %v20, 7
    %v22 = vadd.s32 %v21, 8
    %v23 = vcvt.s32.f32 %v21
    %v24 = vcvt.s32.f32 %v22
    %v25 = vld [vmem:[#allocation2] sm:$0x1]
    %v27 = vlaneseq
    %v28 = vshrl.u32 %v27, 7
    %v29 = vsub.s32 0, %v28
    %v30 = vrot.slane %v25, %v29
    %v32 = vmul.f32 %v23, %v30
    %v33 = vmul.f32 %v24, %v30
    %v34 = vand.u32 2147483647, %v32
    %vm35 = vcmp.le.f32.partialorder %v34, 0.7853982
    %vm36 = vcmp.lt.s32.totalorder %v32, 0
    %v37 = vand.u32 %v32, 2139095040
    %v38 = vshrl.u32 %v37, 23
    %v39 = vsub.s32 %v38, 127
    %v40 = vand.u32 2147483647, %v32
    %v41 = vand.u32 %v40, 8388607
    %v42 = vor.u32 %v41, 8388608
    %v43 = vsub.s32 0, %v42
    %v44 = vadd.s32 %v39, 1
    %vm45 = vcmp.gt.s32.totalorder %v44, 0
    %v46 = vsel %vm45, %v44, 0
    %v47 = vshrl.u32 %v46, 5
    %v48 = vand.u32 %v46, 31
    %v49 = vsub.s32 32, %v48
    %v50 = vshrl.u32 683565275, %v49
    %v51 = vshll.u32 683565275, %v48
    %v52 = vshrl.u32 2475754826, %v49
    %v53 = vor.u32 %v51, %v52
    %v54 = vshll.u32 2475754826, %v48
    %v55 = vshrl.u32 2131351028, %v49
    %v56 = vor.u32 %v54, %v55
    %v57 = vshll.u32 2131351028, %v48
    %v58 = vshrl.u32 2102212464, %v49
    %v59 = vor.u32 %v57, %v58
    %v60 = vshll.u32 2102212464, %v48
    %v61 = vshrl.u32 920167782, %v49
    %v62 = vor.u32 %v60, %v61
    %v63 = vshll.u32 920167782, %v48
    %v64 = vshrl.u32 1326507024, %v49
    %v65 = vor.u32 %v63, %v64
    %vm66 = vcmp.lt.s32.totalorder %v47, 1
    %vm67 = vcmp.lt.s32.totalorder %v47, 2
    %vm68 = vcmp.lt.s32.totalorder %v47, 3
    %vm69 = vcmp.lt.s32.totalorder %v47, 4
    %v70 = vsel %vm66, %v50, %v53
    %v71 = vsel %vm69, %v59, 2102212464
    %v72 = vsel %vm68, %v56, %v71
    %v73 = vsel %vm67, %v70, %v72
    %v74 = vsel %vm66, %v53, %v56
    %v75 = vsel %vm69, %v62, 920167782
    %v76 = vsel %vm68, %v59, %v75
    %v77 = vsel %vm67, %v74, %v76
    %v78 = vsel %vm66, %v56, %v59
    %v79 = vsel %vm69, %v65, 1326507024
    %v80 = vsel %vm68, %v62, %v79
    %v81 = vsel %vm67, %v78, %v80
    %v82 = vshll.u32 %v42, 8
    %v83 = vmul.u32.u64.compose %v82, %v81
    %v84 = vextract.low.u32 %v83
    %v85 = vextract.high.u32 %v83
    %v86 = vmul.u32.u64.compose %v82, %v77
    %v87 = vextract.low.u32 %v86
    %v88 = vextract.high.u32 %v86
    %v89 = vmul.u32 %v82, %v73
    %v90 = vadd.s32 %v85, %v87
    %vm91 = vc.u32 %v85, %v87
    %v92 = vadd.s32 %v88, 1
    %v93 = vsel %vm91, %v92, %v88
    %v94 = vadd.s32 %v89, %v93
    %v95 = vadd.s32 %v94, 536870912
    %v96 = vshrl.u32 %v95, 30
    %v97 = vshll.u32 %v96, 30
    %v98 = vsub.s32 %v94, %v97
    %vm99 = vcmp.lt.s32.totalorder %v98, 0
    %v100 = vsub.s32 0, %v98
    %v101 = vsel %vm99, %v100, %v98
    %v102 = vclz %v101
    %v103 = vsub.s32 %v102, 2
    %vm104 = vcmp.gt.s32.totalorder 0, %v103
    %v105 = vsel %vm104, 0, %v103
    %v106 = vsub.s32 32, %v105
    %v107 = vshll.u32 %v98, %v105
    %v108 = vshrl.u32 %v90, %v106
    %v109 = vor.u32 %v107, %v108
    %v110 = vsub.s32 4294967266, %v105
    %v111 = vadd.s32 %v110, 127
    %v112 = vshll.u32 %v111, 23
    %v113 = vor.u32 4788187, %v112
    %v114 = vand.u32 2147483647, %v113
    %v116 = vcvt.s32.f32 %v109
    %v117 = vmul.f32 %v116, %v114
    %v118 = vxor.u32 %v117, 2147483648
    %v119 = vsel %vm36, %v118, %v117
    %v120 = vsub.s32 4, %v96
    %v121 = vsel %vm36, %v120, %v96
    %v122 = vsel %vm35, %v32, %v119
    %v123 = vsel %vm35, 0, %v121
    %v124 = vcosq.f32.pop %v122
    %v125 = vsinq.f32.pop %v122
    %vm126 = vweird.f32 %v32
    %v127 = vand.u32 %v123, 3
    %vm128 = vcmp.lt.s32.totalorder %v127, 2
    %vm129 = vcmp.eq.s32.totalorder %v127, 0
    %v130 = vxor.u32 %v125, 2147483648
    %v131 = vsel %vm129, %v124, %v130
    %vm132 = vcmp.eq.s32.totalorder %v127, 2
    %v133 = vxor.u32 %v124, 2147483648
    %v134 = vsel %vm132, %v133, %v125
    %v135 = vsel %vm128, %v131, %v134
    %v136 = vsel %vm126, nan, %v135
    %v137 = vand.u32 2147483647, %v33
    %vm138 = vcmp.le.f32.partialorder %v137, 0.7853982
    %vm139 = vcmp.lt.s32.totalorder %v33, 0
    %v140 = vand.u32 %v33, 2139095040
    %v141 = vshrl.u32 %v140, 23
    %v142 = vsub.s32 %v141, 127
    %v143 = vand.u32 2147483647, %v33
    %v144 = vand.u32 %v143, 8388607
    %v145 = vor.u32 %v144, 8388608
    %v146 = vsub.s32 0, %v145
    %v147 = vadd.s32 %v142, 1
    %vm148 = vcmp.gt.s32.totalorder %v147, 0
    %v149 = vsel %vm148, %v147, 0
    %v150 = vshrl.u32 %v149, 5
    %v151 = vand.u32 %v149, 31
    %v152 = vsub.s32 32, %v151
    %v153 = vshrl.u32 683565275, %v152
    %v154 = vshll.u32 683565275, %v151
    %v155 = vshrl.u32 2475754826, %v152
    %v156 = vor.u32 %v154, %v155
    %v157 = vshll.u32 2475754826, %v151
    %v158 = vshrl.u32 2131351028, %v152
    %v159 = vor.u32 %v157, %v158
    %v160 = vshll.u32 2131351028, %v151
    %v161 = vshrl.u32 2102212464, %v152
    %v162 = vor.u32 %v160, %v161
    %v163 = vshll.u32 2102212464, %v151
    %v164 = vshrl.u32 920167782, %v152
    %v165 = vor.u32 %v163, %v164
    %v166 = vshll.u32 920167782, %v151
    %v167 = vshrl.u32 1326507024, %v152
    %v168 = vor.u32 %v166, %v167
    %vm169 = vcmp.lt.s32.totalorder %v150, 1
    %vm170 = vcmp.lt.s32.totalorder %v150, 2
    %vm171 = vcmp.lt.s32.totalorder %v150, 3
    %vm172 = vcmp.lt.s32.totalorder %v150, 4
    %v173 = vsel %vm169, %v153, %v156
    %v174 = vsel %vm172, %v162, 2102212464
    %v175 = vsel %vm171, %v159, %v174
    %v176 = vsel %vm170, %v173, %v175
    %v177 = vsel %vm169, %v156, %v159
    %v178 = vsel %vm172, %v165, 920167782
    %v179 = vsel %vm171, %v162, %v178
    %v180 = vsel %vm170, %v177, %v179
    %v181 = vsel %vm169, %v159, %v162
    %v182 = vsel %vm172, %v168, 1326507024
    %v183 = vsel %vm171, %v165, %v182
    %v184 = vsel %vm170, %v181, %v183
    %v185 = vshll.u32 %v145, 8
    %v186 = vmul.u32.u64.compose %v185, %v184
    %v187 = vextract.low.u32 %v186
    %v188 = vextract.high.u32 %v186
    %v189 = vmul.u32.u64.compose %v185, %v180
    %v190 = vextract.low.u32 %v189
    %v191 = vextract.high.u32 %v189
    %v192 = vmul.u32 %v185, %v176
    %v193 = vadd.s32 %v188, %v190
    %vm194 = vc.u32 %v188, %v190
    %v195 = vadd.s32 %v191, 1
    %v196 = vsel %vm194, %v195, %v191
    %v197 = vadd.s32 %v192, %v196
    %v198 = vadd.s32 %v197, 536870912
    %v199 = vshrl.u32 %v198, 30
    %v200 = vshll.u32 %v199, 30
    %v201 = vsub.s32 %v197, %v200
    %vm202 = vcmp.lt.s32.totalorder %v201, 0
    %v203 = vsub.s32 0, %v201
    %v204 = vsel %vm202, %v203, %v201
    %v205 = vclz %v204
    %v206 = vsub.s32 %v205, 2
    %vm207 = vcmp.gt.s32.totalorder 0, %v206
    %v208 = vsel %vm207, 0, %v206
    %v209 = vsub.s32 32, %v208
    %v210 = vshll.u32 %v201, %v208
    %v211 = vshrl.u32 %v193, %v209
    %v212 = vor.u32 %v210, %v211
    %v213 = vsub.s32 4294967266, %v208
    %v214 = vadd.s32 %v213, 127
    %v215 = vshll.u32 %v214, 23
    %v216 = vor.u32 4788187, %v215
    %v217 = vand.u32 2147483647, %v216
    %v219 = vcvt.s32.f32 %v212
    %v220 = vmul.f32 %v219, %v217
    %v221 = vxor.u32 %v220, 2147483648
    %v222 = vsel %vm139, %v221, %v220
    %v223 = vsub.s32 4, %v199
    %v224 = vsel %vm139, %v223, %v199
    %v225 = vsel %vm138, %v33, %v222
    %v226 = vsel %vm138, 0, %v224
    %v227 = vcosq.f32.pop %v225
    %v228 = vsinq.f32.pop %v225
    %vm229 = vweird.f32 %v33
    %v230 = vand.u32 %v226, 3
    %vm231 = vcmp.lt.s32.totalorder %v230, 2
    %vm232 = vcmp.eq.s32.totalorder %v230, 0
    %v233 = vxor.u32 %v228, 2147483648
    %v234 = vsel %vm232, %v227, %v233
    %vm235 = vcmp.eq.s32.totalorder %v230, 2
    %v236 = vxor.u32 %v227, 2147483648
    %v237 = vsel %vm235, %v236, %v228
    %v238 = vsel %vm231, %v234, %v237
    %v239 = vsel %vm229, nan, %v238
    %v240 = vand.u32 2147483647, %v32
    %vm241 = vcmp.le.f32.partialorder %v240, 0.7853982
    %vm242 = vcmp.lt.s32.totalorder %v32, 0
    %v243 = vand.u32 %v32, 2139095040
    %v244 = vshrl.u32 %v243, 23
    %v245 = vsub.s32 %v244, 127
    %v246 = vand.u32 2147483647, %v32
    %v247 = vand.u32 %v246, 8388607
    %v248 = vor.u32 %v247, 8388608
    %v249 = vsub.s32 0, %v248
    %v250 = vadd.s32 %v245, 1
    %vm251 = vcmp.gt.s32.totalorder %v250, 0
    %v252 = vsel %vm251, %v250, 0
    %v253 = vshrl.u32 %v252, 5
    %v254 = vand.u32 %v252, 31
    %v255 = vsub.s32 32, %v254
    %v256 = vshrl.u32 683565275, %v255
    %v257 = vshll.u32 683565275, %v254
    %v258 = vshrl.u32 2475754826, %v255
    %v259 = vor.u32 %v257, %v258
    %v260 = vshll.u32 2475754826, %v254
    %v261 = vshrl.u32 2131351028, %v255
    %v262 = vor.u32 %v260, %v261
    %v263 = vshll.u32 2131351028, %v254
    %v264 = vshrl.u32 2102212464, %v255
    %v265 = vor.u32 %v263, %v264
    %v266 = vshll.u32 2102212464, %v254
    %v267 = vshrl.u32 920167782, %v255
    %v268 = vor.u32 %v266, %v267
    %v269 = vshll.u32 920167782, %v254
    %v270 = vshrl.u32 1326507024, %v255
    %v271 = vor.u32 %v269, %v270
    %vm272 = vcmp.lt.s32.totalorder %v253, 1
    %vm273 = vcmp.lt.s32.totalorder %v253, 2
    %vm274 = vcmp.lt.s32.totalorder %v253, 3
    %vm275 = vcmp.lt.s32.totalorder %v253, 4
    %v276 = vsel %vm272, %v256, %v259
    %v277 = vsel %vm275, %v265, 2102212464
    %v278 = vsel %vm274, %v262, %v277
    %v279 = vsel %vm273, %v276, %v278
    %v280 = vsel %vm272, %v259, %v262
    %v281 = vsel %vm275, %v268, 920167782
    %v282 = vsel %vm274, %v265, %v281
    %v283 = vsel %vm273, %v280, %v282
    %v284 = vsel %vm272, %v262, %v265
    %v285 = vsel %vm275, %v271, 1326507024
    %v286 = vsel %vm274, %v268, %v285
    %v287 = vsel %vm273, %v284, %v286
    %v288 = vshll.u32 %v248, 8
    %v289 = vmul.u32.u64.compose %v288, %v287
    %v290 = vextract.low.u32 %v289
    %v291 = vextract.high.u32 %v289
    %v292 = vmul.u32.u64.compose %v288, %v283
    %v293 = vextract.low.u32 %v292
    %v294 = vextract.high.u32 %v292
    %v295 = vmul.u32 %v288, %v279
    %v296 = vadd.s32 %v291, %v293
    %vm297 = vc.u32 %v291, %v293
    %v298 = vadd.s32 %v294, 1
    %v299 = vsel %vm297, %v298, %v294
    %v300 = vadd.s32 %v295, %v299
    %v301 = vadd.s32 %v300, 536870912
    %v302 = vshrl.u32 %v301, 30
    %v303 = vshll.u32 %v302, 30
    %v304 = vsub.s32 %v300, %v303
    %vm305 = vcmp.lt.s32.totalorder %v304, 0
    %v306 = vsub.s32 0, %v304
    %v307 = vsel %vm305, %v306, %v304
    %v308 = vclz %v307
    %v309 = vsub.s32 %v308, 2
    %vm310 = vcmp.gt.s32.totalorder 0, %v309
    %v311 = vsel %vm310, 0, %v309
    %v312 = vsub.s32 32, %v311
    %v313 = vshll.u32 %v304, %v311
    %v314 = vshrl.u32 %v296, %v312
    %v315 = vor.u32 %v313, %v314
    %v316 = vsub.s32 4294967266, %v311
    %v317 = vadd.s32 %v316, 127
    %v318 = vshll.u32 %v317, 23
    %v319 = vor.u32 4788187, %v318
    %v320 = vand.u32 2147483647, %v319
    %v322 = vcvt.s32.f32 %v315
    %v323 = vmul.f32 %v322, %v320
    %v324 = vxor.u32 %v323, 2147483648
    %v325 = vsel %vm242, %v324, %v323
    %v326 = vsub.s32 4, %v302
    %v327 = vsel %vm242, %v326, %v302
    %v328 = vsel %vm241, %v32, %v325
    %v329 = vsel %vm241, 0, %v327
    %v330 = vcosq.f32.pop %v328
    %v331 = vsinq.f32.pop %v328
    %vm332 = vweird.f32 %v32
    %v333 = vadd.s32 %v329, 3
    %v334 = vand.u32 %v333, 3
    %vm335 = vcmp.lt.s32.totalorder %v334, 2
    %vm336 = vcmp.eq.s32.totalorder %v334, 0
    %v337 = vxor.u32 %v331, 2147483648
    %v338 = vsel %vm336, %v330, %v337
    %vm339 = vcmp.eq.s32.totalorder %v334, 2
    %v340 = vxor.u32 %v330, 2147483648
    %v341 = vsel %vm339, %v340, %v331
    %v342 = vsel %vm335, %v338, %v341
    %v343 = vsel %vm332, nan, %v342
    %v344 = vand.u32 2147483647, %v33
    %vm345 = vcmp.le.f32.partialorder %v344, 0.7853982
    %vm346 = vcmp.lt.s32.totalorder %v33, 0
    %v347 = vand.u32 %v33, 2139095040
    %v348 = vshrl.u32 %v347, 23
    %v349 = vsub.s32 %v348, 127
    %v350 = vand.u32 2147483647, %v33
    %v351 = vand.u32 %v350, 8388607
    %v352 = vor.u32 %v351, 8388608
    %v353 = vsub.s32 0, %v352
    %v354 = vadd.s32 %v349, 1
    %vm355 = vcmp.gt.s32.totalorder %v354, 0
    %v356 = vsel %vm355, %v354, 0
    %v357 = vshrl.u32 %v356, 5
    %v358 = vand.u32 %v356, 31
    %v359 = vsub.s32 32, %v358
    %v360 = vshrl.u32 683565275, %v359
    %v361 = vshll.u32 683565275, %v358
    %v362 = vshrl.u32 2475754826, %v359
    %v363 = vor.u32 %v361, %v362
    %v364 = vshll.u32 2475754826, %v358
    %v365 = vshrl.u32 2131351028, %v359
    %v366 = vor.u32 %v364, %v365
    %v367 = vshll.u32 2131351028, %v358
    %v368 = vshrl.u32 2102212464, %v359
    %v369 = vor.u32 %v367, %v368
    %v370 = vshll.u32 2102212464, %v358
    %v371 = vshrl.u32 920167782, %v359
    %v372 = vor.u32 %v370, %v371
    %v373 = vshll.u32 920167782, %v358
    %v374 = vshrl.u32 1326507024, %v359
    %v375 = vor.u32 %v373, %v374
    %vm376 = vcmp.lt.s32.totalorder %v357, 1
    %vm377 = vcmp.lt.s32.totalorder %v357, 2
    %vm378 = vcmp.lt.s32.totalorder %v357, 3
    %vm379 = vcmp.lt.s32.totalorder %v357, 4
    %v380 = vsel %vm376, %v360, %v363
    %v381 = vsel %vm379, %v369, 2102212464
    %v382 = vsel %vm378, %v366, %v381
    %v383 = vsel %vm377, %v380, %v382
    %v384 = vsel %vm376, %v363, %v366
    %v385 = vsel %vm379, %v372, 920167782
    %v386 = vsel %vm378, %v369, %v385
    %v387 = vsel %vm377, %v384, %v386
    %v388 = vsel %vm376, %v366, %v369
    %v389 = vsel %vm379, %v375, 1326507024
    %v390 = vsel %vm378, %v372, %v389
    %v391 = vsel %vm377, %v388, %v390
    %v392 = vshll.u32 %v352, 8
    %v393 = vmul.u32.u64.compose %v392, %v391
    %v394 = vextract.low.u32 %v393
    %v395 = vextract.high.u32 %v393
    %v396 = vmul.u32.u64.compose %v392, %v387
    %v397 = vextract.low.u32 %v396
    %v398 = vextract.high.u32 %v396
    %v399 = vmul.u32 %v392, %v383
    %v400 = vadd.s32 %v395, %v397
    %vm401 = vc.u32 %v395, %v397
    %v402 = vadd.s32 %v398, 1
    %v403 = vsel %vm401, %v402, %v398
    %v404 = vadd.s32 %v399, %v403
    %v405 = vadd.s32 %v404, 536870912
    %v406 = vshrl.u32 %v405, 30
    %v407 = vshll.u32 %v406, 30
    %v408 = vsub.s32 %v404, %v407
    %vm409 = vcmp.lt.s32.totalorder %v408, 0
    %v410 = vsub.s32 0, %v408
    %v411 = vsel %vm409, %v410, %v408
    %v412 = vclz %v411
    %v413 = vsub.s32 %v412, 2
    %vm414 = vcmp.gt.s32.totalorder 0, %v413
    %v415 = vsel %vm414, 0, %v413
    %v416 = vsub.s32 32, %v415
    %v417 = vshll.u32 %v408, %v415
    %v418 = vshrl.u32 %v400, %v416
    %v419 = vor.u32 %v417, %v418
    %v420 = vsub.s32 4294967266, %v415
    %v421 = vadd.s32 %v420, 127
    %v422 = vshll.u32 %v421, 23
    %v423 = vor.u32 4788187, %v422
    %v424 = vand.u32 2147483647, %v423
    %v426 = vcvt.s32.f32 %v419
    %v427 = vmul.f32 %v426, %v424
    %v428 = vxor.u32 %v427, 2147483648
    %v429 = vsel %vm346, %v428, %v427
    %v430 = vsub.s32 4, %v406
    %v431 = vsel %vm346, %v430, %v406
    %v432 = vsel %vm345, %v33, %v429
    %v433 = vsel %vm345, 0, %v431
    %v434 = vcosq.f32.pop %v432
    %v435 = vsinq.f32.pop %v432
    %vm436 = vweird.f32 %v33
    %v437 = vadd.s32 %v433, 3
    %v438 = vand.u32 %v437, 3
    %vm439 = vcmp.lt.s32.totalorder %v438, 2
    %vm440 = vcmp.eq.s32.totalorder %v438, 0
    %v441 = vxor.u32 %v435, 2147483648
    %v442 = vsel %vm440, %v434, %v441
    %vm443 = vcmp.eq.s32.totalorder %v438, 2
    %v444 = vxor.u32 %v434, 2147483648
    %v445 = vsel %vm443, %v444, %v435
    %v446 = vsel %vm439, %v442, %v445
    %v447 = vsel %vm436, nan, %v446
    %450 = vrot.lane.b32.xlu0 %v343, 4
    %v451 = vpop.permute.xlu0 %450
    %452 = vrot.lane.b32.xlu0 %v447, 4
    %v453 = vpop.permute.xlu0 %452
    %vm456 = vcmask 31744
    %v457 = vsel %vm456, %v136, %v451
    %v458 = vsel %vm456, %v239, %v453
    %vm459 = vcmask 64512
    %460 = vst.msk [vmem:[%s1] sm:$0xff] %vm459, %v457
    %461 = vst.msk [vmem:[%s1 + $0x8] sm:$0xff] %vm459, %v458
    // Predicated region
    $region10: #{tpu_custom_call.1} parent=1 // pred_check
      _
    $region11: #{tpu_custom_call.1} parent=1 // pred_check_branch
      %463 = sbr.rel (0) target = $region13
    $region12: #{tpu_custom_call.1} parent=1 // pred_region
      _
    $region13: #{tpu_custom_call.1} parent=1 // pred_fallthru
      _
    // Predicated region
    $region14: #{tpu_custom_call.1} parent=1 // pred_check
      _
    $region15: #{tpu_custom_call.1} parent=1 // pred_check_branch
      %465 = sbr.rel (0) target = $region17
    $region16: #{tpu_custom_call.1} parent=1 // pred_region
      _
    $region17: #{tpu_custom_call.1} parent=1 // pred_fallthru
      _
    %466 = vsyncpa [#allocation3], 1

</llo_original>
